<compile_context>
chip_gen: v7x
topology: tpu7x:2x2x1
jax: 0.10.0
libtpu: 0.0.40
codegen_flags: <defaults>
</compile_context>

<pallas_src>
import jax
import jax.numpy as jnp
from jax.experimental import pallas as pl
from jax.experimental.pallas import tpu as pltpu

LANES = 128                       # vreg lane width (fast axis)
TILE_R_MAX = 4096                 # 4096*128*4 B = 2 MiB per f32 tile
PALLAS_MIN_ELEMS = 128 * 1024     # below this a single fused XLA op wins
VMEM_LIMIT_BYTES = 32 * 1024 * 1024


def _round_up(v, m):
    return ((v + m - 1) // m) * m


def _linear_kernel(x_ref, w_ref, b_ref, o_ref):
    # x_ref / o_ref: (tile_r, 128) VMEM tiles; w_ref / b_ref: (1,1) SMEM scalars.
    w = w_ref[0, 0]                     # hoisted scalar reads, once per grid step
    b = b_ref[0, 0]
    o_ref[...] = (x_ref[...].astype(jnp.float32) * w + b).astype(o_ref.dtype)


def linear_forward(x, weight, bias):
    """y = x @ weight.T + bias for weight (1,1), bias (1,). Output shape == x.shape."""
    out_dtype = x.dtype
    w = weight.reshape(()).astype(jnp.float32)
    b = bias.reshape(()).astype(jnp.float32)

    total = x.size
    aligned = (total // LANES) * LANES

    # Tiny / medium batches: a fused XLA scale+shift is already at HBM roofline
    # with zero extra copies -- skip Pallas entirely.
    if total < PALLAS_MIN_ELEMS or aligned == 0:
        return (x.astype(jnp.float32) * w + b).astype(out_dtype)

    flat = x.reshape(-1)                       # (..., 1) -> (N,)  : free
    rows = aligned // LANES

    # Minimum sublane granularity per dtype: 8 (f32) / 16 (bf16) / 32 (int8).
    sub = max(8, 32 // jnp.dtype(out_dtype).itemsize)

    # Tile as large as possible (amortize ~0.35 us per-step overhead) while
    # keeping >= 2 grid steps so v7x megacore can shard the grid.
    tile_r = min(TILE_R_MAX, _round_up(pl.cdiv(rows, 2), sub))
    grid = (pl.cdiv(rows, tile_r),)            # partial last block handled/masked by Pallas

    slab = flat[:aligned].reshape(rows, LANES)  # lane-dense view of the aligned prefix
    w2 = w.reshape(1, 1)
    b2 = b.reshape(1, 1)

    y_prefix = pl.pallas_call(
        _linear_kernel,
        out_shape=jax.ShapeDtypeStruct((rows, LANES), out_dtype),
        grid=grid,
        in_specs=[
            pl.BlockSpec((tile_r, LANES), lambda i: (i, 0)),   # x tile (VMEM, double-buffered)
            pl.BlockSpec(memory_space=pltpu.SMEM),             # weight scalar
            pl.BlockSpec(memory_space=pltpu.SMEM),             # bias scalar
        ],
        out_specs=pl.BlockSpec((tile_r, LANES), lambda i: (i, 0)),
        compiler_params=pltpu.CompilerParams(
            dimension_semantics=("parallel",),                 # shard across TCs on v7x
            vmem_limit_bytes=VMEM_LIMIT_BYTES,
        ),
    )(slab, w2, b2).reshape(-1)

    if aligned == total:
        return y_prefix.reshape(x.shape)

    # Ragged tail (< 128 elements): fused XLA, stitched onto the Pallas prefix.
    # TODO(synk): the concatenate costs one extra output pass when N % 128 != 0;
    # unavoidable without an in-kernel unaligned gather, and skipped otherwise.
    tail = flat[aligned:]
    y_tail = (tail.astype(jnp.float32) * w + b).astype(out_dtype)
    return jnp.concatenate([y_prefix, y_tail]).reshape(x.shape)


if __name__ == "__main__":
    key = jax.random.PRNGKey(0)
    kx1, kx2, kx3, kw, kb = jax.random.split(key, 5)

    # Deterministic "parameters" (torch.nn.Linear(1, 1) -> weight (1,1), bias (1,)).
    weight = jax.random.uniform(kw, (1, 1), jnp.float32, minval=-1.0, maxval=1.0)
    bias = jax.random.uniform(kb, (1,), jnp.float32, minval=-1.0, maxval=1.0)

    # Case 1: tiny batch -> fused XLA fallback path.
    x_small = jax.random.normal(kx1, (8, 1), jnp.float32)
    y_small = linear_forward(x_small, weight, bias)
    jax.block_until_ready(y_small)
    ref_small = x_small @ weight.T + bias
    assert y_small.shape == (8, 1)
    assert jnp.allclose(y_small, ref_small, atol=1e-6)

    # Case 2: 128-aligned batch -> Pallas path, no tail, zero extra copies.
    n_mid = 262144                               # rows=2048, tile_r=1024, grid=(2,)
    x_mid = jax.random.normal(kx2, (n_mid, 1), jnp.float32)
    y_mid = linear_forward(x_mid, weight, bias)
    jax.block_until_ready(y_mid)
    ref_mid = x_mid @ weight.T + bias
    assert y_mid.shape == (n_mid, 1)
    assert jnp.allclose(y_mid, ref_mid, atol=1e-6)

    # Case 3: ragged batch -> Pallas on aligned prefix (partial last grid block)
    # plus XLA tail.
    n_big = 262144 + 128 * 3 + 37                # rows=2051 -> tile_r=1032, grid=(2,), 37-elem tail
    x_big = jax.random.normal(kx3, (n_big, 1), jnp.float32)
    y_big = linear_forward(x_big, weight, bias)
    jax.block_until_ready(y_big)
    ref_big = x_big @ weight.T + bias
    assert y_big.shape == (n_big, 1)
    assert jnp.allclose(y_big, ref_big, atol=1e-6)

    print("KERNEL_OK")
</pallas_src>

<mosaic_0001>
module attributes {stable_mosaic.version = 11 : i64} {
  func.func @_linear_kernel(%arg0: i32, %arg1: memref<1024x128xf32, #tpu.memory_space<vmem>>, %arg2: memref<1x1xf32, #tpu.memory_space<smem>>, %arg3: memref<1x1xf32, #tpu.memory_space<smem>>, %arg4: memref<1024x128xf32, #tpu.memory_space<vmem>>) attributes {dimension_semantics = [#tpu.dimension_semantics<parallel>], iteration_bounds = array<i64: 2>, scalar_prefetch = 0 : i64, scratch_operands = 0 : i64, tpu.core_type = #tpu.core_type<tc>, window_params = [{transform_indices = @transform_0, window_bounds = array<i64: 1024, 128>}, {transform_indices = @transform_1, window_bounds = array<i64: 1, 1>}, {transform_indices = @transform_2, window_bounds = array<i64: 1, 1>}, {transform_indices = @transform_3, window_bounds = array<i64: 1024, 128>}]} {
    %c0 = arith.constant 0 : index
    %c0_0 = arith.constant 0 : index
    %0 = memref.load %arg2[%c0, %c0_0] : memref<1x1xf32, #tpu.memory_space<smem>>
    %c0_1 = arith.constant 0 : index
    %c0_2 = arith.constant 0 : index
    %1 = memref.load %arg3[%c0_1, %c0_2] : memref<1x1xf32, #tpu.memory_space<smem>>
    %c0_3 = arith.constant 0 : index
    %c0_4 = arith.constant 0 : index
    %2 = vector.load %arg1[%c0_3, %c0_4] : memref<1024x128xf32, #tpu.memory_space<vmem>>, vector<1024x128xf32>
    %3 = vector.broadcast %0 : f32 to vector<1024x128xf32>
    %4 = arith.mulf %2, %3 : vector<1024x128xf32>
    %5 = vector.broadcast %1 : f32 to vector<1024x128xf32>
    %6 = arith.addf %4, %5 : vector<1024x128xf32>
    %c0_5 = arith.constant 0 : index
    %c0_6 = arith.constant 0 : index
    %7 = vector.load %arg4[%c0_5, %c0_6] : memref<1024x128xf32, #tpu.memory_space<vmem>>, vector<1024x128xf32>
    tpu.vector_store %arg4[%c0_5, %c0_6], %6 {strides = array<i32>} : memref<1024x128xf32, #tpu.memory_space<vmem>>, vector<1024x128xf32>,
    return
  }
  func.func @transform_0(%arg0: i32) -> (i32, i32) {
    %c0_i32 = arith.constant 0 : i32
    %c0_i32_0 = arith.constant 0 : i32
    return %arg0, %c0_i32 : i32, i32
  }
  func.func @transform_1(%arg0: i32) -> (i32, i32) {
    %c0_i32 = arith.constant 0 : i32
    %c0_i32_0 = arith.constant 0 : i32
    %c0_i32_1 = arith.constant 0 : i32
    return %c0_i32, %c0_i32_0 : i32, i32
  }
  func.func @transform_2(%arg0: i32) -> (i32, i32) {
    %c0_i32 = arith.constant 0 : i32
    %c0_i32_0 = arith.constant 0 : i32
    %c0_i32_1 = arith.constant 0 : i32
    return %c0_i32, %c0_i32_0 : i32, i32
  }
  func.func @transform_3(%arg0: i32) -> (i32, i32) {
    %c0_i32 = arith.constant 0 : i32
    %c0_i32_0 = arith.constant 0 : i32
    return %arg0, %c0_i32 : i32, i32
  }
}

</mosaic_0001>

<llo_original>
// kernel: tpu_custom_call.1
$region0: #{tpu_custom_call.1}
  #allocation0 [shape = 'u32[]', space=smem, size = 0x4, offset = 0x4, fixed_abs, tag = 'smem constant byte address 0x4 - core index']
  #allocation1 [shape = 'u32[144,128]{1,0:T(1,128)}', space=vmem, size = 0x12000, scoped, tag = 'internal scratch']
  #allocation2 [shape = 'f32[1,1]{1,0:T(1,128)S(6)}', space=smem, size = 0x200, scoped, tag = 'scoped memory for tpu_custom_call.1']
  #allocation3 [shape = 'f32[1,1]{1,0:T(1,128)S(6)}', space=smem, size = 0x200, scoped, tag = 'scoped memory for tpu_custom_call.1']
  %s0 = inlined_call_operand.hbm [shape: f32[2048,128], index: 0, kind: input, shape index: {}]
  %s1 = inlined_call_operand.<no memory space> [shape: f32[1,1], index: 1, kind: input, shape index: {}]
  %s2 = inlined_call_operand.<no memory space> [shape: f32[1,1], index: 2, kind: input, shape index: {}]
  %s3 = inlined_call_operand.hbm [shape: f32[2048,128], index: 3, kind: output, shape index: {}]
  %s4 = sld [smem:[#allocation0]]
  $region49: #{tpu_custom_call.1} parent=0
    _
  %s6 = ssub.s32 1, %s4
  %s7 = scalar_select 0, %s6, %s4
  %8 = sst [smem:[#allocation2]] %s1
  %9 = sst [smem:[#allocation3]] %s2
  $region1: #{tpu_custom_call.1} parent=0
    #allocation4 [shape = 'u8[1048576]{0}', space=vmem, size = 0x100000, scoped, tag = 'input window, operand 0']
    #allocation5 [shape = 's32[2]{0}', space=sflag, size = 0x8, scoped, tag = 'scoped memory for tpu_custom_call.1']
    #allocation6 [shape = 's32[2]{0}', space=sflag, size = 0x8, scoped, tag = 'scoped memory for tpu_custom_call.1']
    #allocation7 [shape = 'u8[1048576]{0}', space=vmem, size = 0x100000, scoped, tag = 'output window, operand 0']
    %10 = vsyncpa [#allocation5], 0
    %s11 = scalar_lea.sflag [#allocation5], 1
    %12 = vsyncpa %s11, 0
    %13 = vsyncpa [#allocation6], 0
    %s14 = scalar_lea.sflag [#allocation6], 1
    %15 = vsyncpa %s14, 0
    loop: start=0, step=1, limit=4
    $region2: #{tpu_custom_call.1} parent=1 // loop_pre_header
      _
    $region3: #{tpu_custom_call.1} parent=1 // loop_header
      %s17 = sphi 0, %s21
      %p18 = scmp.ge.s32.totalorder %s17, 4
      %s27 = sphi 0, %s29
      %s30 = sphi 0, %s27
      %s31 = sphi 0, %s30
      %s47 = sphi 0, %s31
      %s51 = sphi 0, %s51
      %s53 = sphi 0, %s51
      %s54 = sphi 0, %s53
      %s68 = sphi 0, %s54
      %s72 = sphi 0, %s72
      %s74 = sphi 0, %s72
      %s75 = sphi 0, %s74
      %s89 = sphi 0, %s75
      %s95 = sphi 0, %s97
      %s98 = sphi 0, %s95
      %s99 = sphi 0, %s98
      %s115 = sphi 0, %s99
    $region4: #{tpu_custom_call.1} parent=1 // loop_header_branch
      %20 = sbr.rel (%p18) target = $region8
    $region5: #{tpu_custom_call.1} parent=1 // loop_body
      %s22 = ssub.s32 %s17, 1
      %s23 = ssub.s32 %s17, 2
      %s24 = sadd.s32 %s17, 1
      %s25 = ssub.s32 %s17, %s24
      %p26 = scmp.eq.s32.totalorder %s25, 0
      %s28 = sadd.s32 %s27, 1
      %s29 = scalar_select %p26, %s27, %s28
      %p32 = pneg %p26
      %p33 = scmp.eq.s32.totalorder %s17, 1
      %p34 = por %p32, %p33
      %p35 = scmp.ne.s32.totalorder %s27, %s30
      %p36 = scmp.eq.s32.totalorder %s17, 0
      %p37 = por %p35, %p36
      %p38 = scmp.ne.s32.totalorder %s27, %s30
      %p39 = scmp.eq.s32.totalorder %s22, 1
      %p40 = por %p38, %p39
      %p41 = scmp.ne.s32.totalorder %s30, %s31
      %p42 = scmp.eq.s32.totalorder %s22, 0
      %p43 = por %p41, %p42
      %p44 = scmp.ne.s32.totalorder %s30, %s31
      %p45 = scmp.eq.s32.totalorder %s23, 1
      %p46 = por %p44, %p45
      %p48 = scmp.ne.s32.totalorder %s31, %s47
      %p49 = scmp.eq.s32.totalorder %s23, 0
      %p50 = por %p48, %p49
      %s52 = sadd.s32 %s51, 1
      %p55 = scmp.eq.s32.totalorder %s17, 1
      %p56 = scmp.ne.s32.totalorder %s51, %s53
      %p57 = scmp.eq.s32.totalorder %s17, 0
      %p58 = por %p56, %p57
      %p59 = scmp.ne.s32.totalorder %s51, %s53
      %p60 = scmp.eq.s32.totalorder %s22, 1
      %p61 = por %p59, %p60
      %p62 = scmp.ne.s32.totalorder %s53, %s54
      %p63 = scmp.eq.s32.totalorder %s22, 0
      %p64 = por %p62, %p63
      %p65 = scmp.ne.s32.totalorder %s53, %s54
      %p66 = scmp.eq.s32.totalorder %s23, 1
      %p67 = por %p65, %p66
      %p69 = scmp.ne.s32.totalorder %s54, %s68
      %p70 = scmp.eq.s32.totalorder %s23, 0
      %p71 = por %p69, %p70
      %s73 = sadd.s32 %s72, 1
      %p76 = scmp.eq.s32.totalorder %s17, 1
      %p77 = scmp.ne.s32.totalorder %s72, %s74
      %p78 = scmp.eq.s32.totalorder %s17, 0
      %p79 = por %p77, %p78
      %p80 = scmp.ne.s32.totalorder %s72, %s74
      %p81 = scmp.eq.s32.totalorder %s22, 1
      %p82 = por %p80, %p81
      %p83 = scmp.ne.s32.totalorder %s74, %s75
      %p84 = scmp.eq.s32.totalorder %s22, 0
      %p85 = por %p83, %p84
      %p86 = scmp.ne.s32.totalorder %s74, %s75
      %p87 = scmp.eq.s32.totalorder %s23, 1
      %p88 = por %p86, %p87
      %p90 = scmp.ne.s32.totalorder %s75, %s89
      %p91 = scmp.eq.s32.totalorder %s23, 0
      %p92 = por %p90, %p91
      %s93 = ssub.s32 %s17, %s24
      %p94 = scmp.eq.s32.totalorder %s93, 0
      %s96 = sadd.s32 %s95, 1
      %s97 = scalar_select %p94, %s95, %s96
      %p100 = pneg %p94
      %p101 = scmp.eq.s32.totalorder %s17, 1
      %p102 = por %p100, %p101
      %p103 = scmp.ne.s32.totalorder %s95, %s98
      %p104 = scmp.eq.s32.totalorder %s17, 0
      %p105 = por %p103, %p104
      %p106 = scmp.ne.s32.totalorder %s95, %s98
      %p107 = scmp.eq.s32.totalorder %s22, 1
      %p108 = por %p106, %p107
      %p109 = scmp.ne.s32.totalorder %s98, %s99
      %p110 = scmp.eq.s32.totalorder %s22, 0
      %p111 = por %p109, %p110
      %p112 = scmp.ne.s32.totalorder %s98, %s99
      %p113 = scmp.eq.s32.totalorder %s23, 1
      %p114 = por %p112, %p113
      %p116 = scmp.ne.s32.totalorder %s99, %s115
      %p117 = scmp.eq.s32.totalorder %s23, 0
      %p118 = por %p116, %p117
      %p119 = scmp.le.s32.totalorder 1, %s17
      %p120 = scmp.lt.s32.totalorder %s17, 3
      %p121 = pnand %p119, %p120
      %p122 = pneg %p121
      // Predicated region
      $region9: #{tpu_custom_call.1} parent=5 // pred_check
        _
      $region10: #{tpu_custom_call.1} parent=5 // pred_check_branch
        %124 = sbr.rel (%p121) target = $region12
      $region11: #{tpu_custom_call.1} parent=5 // pred_region
        %s125 = ssub.s32 %s17, 1
        // Predicated region
        $region13: #{tpu_custom_call.1} parent=11 // pred_check
          %p126 = pneg %p64
        $region14: #{tpu_custom_call.1} parent=11 // pred_check_branch
          %128 = sbr.rel (%p126) target = $region16
        $region15: #{tpu_custom_call.1} parent=11 // pred_region
          _
        $region16: #{tpu_custom_call.1} parent=11 // pred_fallthru
          _
        // Predicated region
        $region17: #{tpu_custom_call.1} parent=11 // pred_check
          %p129 = pneg %p85
        $region18: #{tpu_custom_call.1} parent=11 // pred_check_branch
          %131 = sbr.rel (%p129) target = $region20
        $region19: #{tpu_custom_call.1} parent=11 // pred_region
          _
        $region20: #{tpu_custom_call.1} parent=11 // pred_fallthru
          _
      $region12: #{tpu_custom_call.1} parent=5 // pred_fallthru
        _
      %p132 = scmp.lt.s32.totalorder %s17, 2
      // Predicated region
      $region21: #{tpu_custom_call.1} parent=5 // pred_check
        %p133 = pneg %p132
      $region22: #{tpu_custom_call.1} parent=5 // pred_check_branch
        %135 = sbr.rel (%p133) target = $region24
      $region23: #{tpu_custom_call.1} parent=5 // pred_region
        // Predicated region
        $region25: #{tpu_custom_call.1} parent=23 // pred_check
          %p136 = pneg %p37
        $region26: #{tpu_custom_call.1} parent=23 // pred_check_branch
          %138 = sbr.rel (%p136) target = $region28
        $region27: #{tpu_custom_call.1} parent=23 // pred_region
          %s139 = sand.u32 %s27, 1
          %s140 = scalar_lea.sflag [#allocation5], %s139
          %s141 = sand.u32 %s27, 1
          %s142 = smul.addr %s141, 1024
          %s143 = scalar_lea.vmem [#allocation4], %s142
          %s144 = smul.u32 128, %s17
          %s146 = ssub.s32 16384, 16384
          %147 = vsyncadd %s140, %s146
          %s148 = smul.addr %s144, 128
          %s149 = scalar_lea.hbm %s0, %s148
          %s150 = sshll.u32 %s143, 4
          %s151 = int_to_ptr.vmem [resolvable:$true] %s150
          %156 = dma.hbm_to_vmem [thread:$0]  %s149, 16384, %s151, %s140, 128, 128, 8
        $region28: #{tpu_custom_call.1} parent=23 // pred_fallthru
          _
      $region24: #{tpu_custom_call.1} parent=5 // pred_fallthru
        _
      %p157 = scmp.le.s32.totalorder 1, %s17
      %p158 = scmp.lt.s32.totalorder %s17, 3
      %p159 = pnand %p157, %p158
      %p160 = pneg %p159
      // Predicated region
      $region29: #{tpu_custom_call.1} parent=5 // pred_check
        _
      $region30: #{tpu_custom_call.1} parent=5 // pred_check_branch
        %162 = sbr.rel (%p159) target = $region32
      $region31: #{tpu_custom_call.1} parent=5 // pred_region
        %s163 = ssub.s32 %s17, 1
        %s164 = sand.u32 %s30, 1
        %s165 = scalar_lea.sflag [#allocation5], %s164
        %s166 = sand.u32 %s30, 1
        %s167 = smul.addr %s166, 1024
        %s168 = scalar_lea.vmem [#allocation4], %s167
        // Predicated region
        $region33: #{tpu_custom_call.1} parent=31 // pred_check
          %p169 = pneg %p43
        $region34: #{tpu_custom_call.1} parent=31 // pred_check_branch
          %171 = sbr.rel (%p169) target = $region36
        $region35: #{tpu_custom_call.1} parent=31 // pred_region
          %172 = dma.done %s165, 16384
        $region36: #{tpu_custom_call.1} parent=31 // pred_fallthru
          _
        %s173 = sand.u32 %s30, 1
        %s174 = scalar_lea.sflag [#allocation5], %s173
        %s175 = sand.u32 %s30, 1
        %s176 = smul.addr %s175, 1024
        %s177 = scalar_lea.vmem [#allocation4], %s176
        %p178 = pneg %p43
        %p179 = pneg %p40
        %p180 = pneg %p64
        %p181 = pneg %p61
        %p182 = pneg %p85
        %p183 = pneg %p82
        %p184 = pneg %p111
        %p185 = pneg %p108
        %s186 = sand.u32 %s98, 1
        %s187 = scalar_lea.sflag [#allocation6], %s186
        %s188 = sand.u32 %s98, 1
        %s189 = smul.addr %s188, 1024
        %s190 = scalar_lea.vmem [#allocation7], %s189
        %s191 = smul.u32 128, %s22
        %s192 = smul.u32 128, %s22
        %s193 = sld [smem:[#allocation2]]
        %s194 = sld [smem:[#allocation3]]
        %v195 = vld [vmem:[%s168] sm:$0xff]
        %v196 = vld [vmem:[%s168 + $0x8] sm:$0xff]
        %v197 = vld [vmem:[%s168 + $0x10] sm:$0xff]
        %v198 = vld [vmem:[%s168 + $0x18] sm:$0xff]
        %v199 = vld [vmem:[%s168 + $0x20] sm:$0xff]
        %v200 = vld [vmem:[%s168 + $0x28] sm:$0xff]
        %v201 = vld [vmem:[%s168 + $0x30] sm:$0xff]
        %v202 = vld [vmem:[%s168 + $0x38] sm:$0xff]
        %v203 = vld [vmem:[%s168 + $0x40] sm:$0xff]
        %v204 = vld [vmem:[%s168 + $0x48] sm:$0xff]
        %v205 = vld [vmem:[%s168 + $0x50] sm:$0xff]
        %v206 = vld [vmem:[%s168 + $0x58] sm:$0xff]
        %v207 = vld [vmem:[%s168 + $0x60] sm:$0xff]
        %v208 = vld [vmem:[%s168 + $0x68] sm:$0xff]
        %v209 = vld [vmem:[%s168 + $0x70] sm:$0xff]
        %v210 = vld [vmem:[%s168 + $0x78] sm:$0xff]
        %v211 = vld [vmem:[%s168 + $0x80] sm:$0xff]
        %v212 = vld [vmem:[%s168 + $0x88] sm:$0xff]
        %v213 = vld [vmem:[%s168 + $0x90] sm:$0xff]
        %v214 = vld [vmem:[%s168 + $0x98] sm:$0xff]
        %v215 = vld [vmem:[%s168 + $0xa0] sm:$0xff]
        %v216 = vld [vmem:[%s168 + $0xa8] sm:$0xff]
        %v217 = vld [vmem:[%s168 + $0xb0] sm:$0xff]
        %v218 = vld [vmem:[%s168 + $0xb8] sm:$0xff]
        %v219 = vld [vmem:[%s168 + $0xc0] sm:$0xff]
        %v220 = vld [vmem:[%s168 + $0xc8] sm:$0xff]
        %v221 = vld [vmem:[%s168 + $0xd0] sm:$0xff]
        %v222 = vld [vmem:[%s168 + $0xd8] sm:$0xff]
        %v223 = vld [vmem:[%s168 + $0xe0] sm:$0xff]
        %v224 = vld [vmem:[%s168 + $0xe8] sm:$0xff]
        %v225 = vld [vmem:[%s168 + $0xf0] sm:$0xff]
        %v226 = vld [vmem:[%s168 + $0xf8] sm:$0xff]
        %v227 = vld [vmem:[%s168 + $0x100] sm:$0xff]
        %v228 = vld [vmem:[%s168 + $0x108] sm:$0xff]
        %v229 = vld [vmem:[%s168 + $0x110] sm:$0xff]
        %v230 = vld [vmem:[%s168 + $0x118] sm:$0xff]
        %v231 = vld [vmem:[%s168 + $0x120] sm:$0xff]
        %v232 = vld [vmem:[%s168 + $0x128] sm:$0xff]
        %v233 = vld [vmem:[%s168 + $0x130] sm:$0xff]
        %v234 = vld [vmem:[%s168 + $0x138] sm:$0xff]
        %v235 = vld [vmem:[%s168 + $0x140] sm:$0xff]
        %v236 = vld [vmem:[%s168 + $0x148] sm:$0xff]
        %v237 = vld [vmem:[%s168 + $0x150] sm:$0xff]
        %v238 = vld [vmem:[%s168 + $0x158] sm:$0xff]
        %v239 = vld [vmem:[%s168 + $0x160] sm:$0xff]
        %v240 = vld [vmem:[%s168 + $0x168] sm:$0xff]
        %v241 = vld [vmem:[%s168 + $0x170] sm:$0xff]
        %v242 = vld [vmem:[%s168 + $0x178] sm:$0xff]
        %v243 = vld [vmem:[%s168 + $0x180] sm:$0xff]
        %v244 = vld [vmem:[%s168 + $0x188] sm:$0xff]
        %v245 = vld [vmem:[%s168 + $0x190] sm:$0xff]
        %v246 = vld [vmem:[%s168 + $0x198] sm:$0xff]
        %v247 = vld [vmem:[%s168 + $0x1a0] sm:$0xff]
        %v248 = vld [vmem:[%s168 + $0x1a8] sm:$0xff]
        %v249 = vld [vmem:[%s168 + $0x1b0] sm:$0xff]
        %v250 = vld [vmem:[%s168 + $0x1b8] sm:$0xff]
        %v251 = vld [vmem:[%s168 + $0x1c0] sm:$0xff]
        %v252 = vld [vmem:[%s168 + $0x1c8] sm:$0xff]
        %v253 = vld [vmem:[%s168 + $0x1d0] sm:$0xff]
        %v254 = vld [vmem:[%s168 + $0x1d8] sm:$0xff]
        %v255 = vld [vmem:[%s168 + $0x1e0] sm:$0xff]
        %v256 = vld [vmem:[%s168 + $0x1e8] sm:$0xff]
        %v257 = vld [vmem:[%s168 + $0x1f0] sm:$0xff]
        %v258 = vld [vmem:[%s168 + $0x1f8] sm:$0xff]
        %v259 = vld [vmem:[%s168 + $0x200] sm:$0xff]
        %v260 = vld [vmem:[%s168 + $0x208] sm:$0xff]
        %v261 = vld [vmem:[%s168 + $0x210] sm:$0xff]
        %v262 = vld [vmem:[%s168 + $0x218] sm:$0xff]
        %v263 = vld [vmem:[%s168 + $0x220] sm:$0xff]
        %v264 = vld [vmem:[%s168 + $0x228] sm:$0xff]
        %v265 = vld [vmem:[%s168 + $0x230] sm:$0xff]
        %v266 = vld [vmem:[%s168 + $0x238] sm:$0xff]
        %v267 = vld [vmem:[%s168 + $0x240] sm:$0xff]
        %v268 = vld [vmem:[%s168 + $0x248] sm:$0xff]
        %v269 = vld [vmem:[%s168 + $0x250] sm:$0xff]
        %v270 = vld [vmem:[%s168 + $0x258] sm:$0xff]
        %v271 = vld [vmem:[%s168 + $0x260] sm:$0xff]
        %v272 = vld [vmem:[%s168 + $0x268] sm:$0xff]
        %v273 = vld [vmem:[%s168 + $0x270] sm:$0xff]
        %v274 = vld [vmem:[%s168 + $0x278] sm:$0xff]
        %v275 = vld [vmem:[%s168 + $0x280] sm:$0xff]
        %v276 = vld [vmem:[%s168 + $0x288] sm:$0xff]
        %v277 = vld [vmem:[%s168 + $0x290] sm:$0xff]
        %v278 = vld [vmem:[%s168 + $0x298] sm:$0xff]
        %v279 = vld [vmem:[%s168 + $0x2a0] sm:$0xff]
        %v280 = vld [vmem:[%s168 + $0x2a8] sm:$0xff]
        %v281 = vld [vmem:[%s168 + $0x2b0] sm:$0xff]
        %v282 = vld [vmem:[%s168 + $0x2b8] sm:$0xff]
        %v283 = vld [vmem:[%s168 + $0x2c0] sm:$0xff]
        %v284 = vld [vmem:[%s168 + $0x2c8] sm:$0xff]
        %v285 = vld [vmem:[%s168 + $0x2d0] sm:$0xff]
        %v286 = vld [vmem:[%s168 + $0x2d8] sm:$0xff]
        %v287 = vld [vmem:[%s168 + $0x2e0] sm:$0xff]
        %v288 = vld [vmem:[%s168 + $0x2e8] sm:$0xff]
        %v289 = vld [vmem:[%s168 + $0x2f0] sm:$0xff]
        %v290 = vld [vmem:[%s168 + $0x2f8] sm:$0xff]
        %v291 = vld [vmem:[%s168 + $0x300] sm:$0xff]
        %v292 = vld [vmem:[%s168 + $0x308] sm:$0xff]
        %v293 = vld [vmem:[%s168 + $0x310] sm:$0xff]
        %v294 = vld [vmem:[%s168 + $0x318] sm:$0xff]
        %v295 = vld [vmem:[%s168 + $0x320] sm:$0xff]
        %v296 = vld [vmem:[%s168 + $0x328] sm:$0xff]
        %v297 = vld [vmem:[%s168 + $0x330] sm:$0xff]
        %v298 = vld [vmem:[%s168 + $0x338] sm:$0xff]
        %v299 = vld [vmem:[%s168 + $0x340] sm:$0xff]
        %v300 = vld [vmem:[%s168 + $0x348] sm:$0xff]
        %v301 = vld [vmem:[%s168 + $0x350] sm:$0xff]
        %v302 = vld [vmem:[%s168 + $0x358] sm:$0xff]
        %v303 = vld [vmem:[%s168 + $0x360] sm:$0xff]
        %v304 = vld [vmem:[%s168 + $0x368] sm:$0xff]
        %v305 = vld [vmem:[%s168 + $0x370] sm:$0xff]
        %v306 = vld [vmem:[%s168 + $0x378] sm:$0xff]
        %v307 = vld [vmem:[%s168 + $0x380] sm:$0xff]
        %v308 = vld [vmem:[%s168 + $0x388] sm:$0xff]
        %v309 = vld [vmem:[%s168 + $0x390] sm:$0xff]
        %v310 = vld [vmem:[%s168 + $0x398] sm:$0xff]
        %v311 = vld [vmem:[%s168 + $0x3a0] sm:$0xff]
        %v312 = vld [vmem:[%s168 + $0x3a8] sm:$0xff]
        %v313 = vld [vmem:[%s168 + $0x3b0] sm:$0xff]
        %v314 = vld [vmem:[%s168 + $0x3b8] sm:$0xff]
        %v315 = vld [vmem:[%s168 + $0x3c0] sm:$0xff]
        %v316 = vld [vmem:[%s168 + $0x3c8] sm:$0xff]
        %v317 = vld [vmem:[%s168 + $0x3d0] sm:$0xff]
        %v318 = vld [vmem:[%s168 + $0x3d8] sm:$0xff]
        %v319 = vld [vmem:[%s168 + $0x3e0] sm:$0xff]
        %v320 = vld [vmem:[%s168 + $0x3e8] sm:$0xff]
        %v321 = vld [vmem:[%s168 + $0x3f0] sm:$0xff]
        %v322 = vld [vmem:[%s168 + $0x3f8] sm:$0xff]
        %v323 = vstv %s193
        %v324 = vmul.f32 %v195, %v323
        %v325 = vmul.f32 %v196, %v323
        %v326 = vmul.f32 %v197, %v323
        %v327 = vmul.f32 %v198, %v323
        %v328 = vmul.f32 %v199, %v323
        %v329 = vmul.f32 %v200, %v323
        %v330 = vmul.f32 %v201, %v323
        %v331 = vmul.f32 %v202, %v323
        %v332 = vmul.f32 %v203, %v323
        %v333 = vmul.f32 %v204, %v323
        %v334 = vmul.f32 %v205, %v323
        %v335 = vmul.f32 %v206, %v323
        %v336 = vmul.f32 %v207, %v323
        %v337 = vmul.f32 %v208, %v323
        %v338 = vmul.f32 %v209, %v323
        %v339 = vmul.f32 %v210, %v323
        %v340 = vmul.f32 %v211, %v323
        %v341 = vmul.f32 %v212, %v323
        %v342 = vmul.f32 %v213, %v323
        %v343 = vmul.f32 %v214, %v323
        %v344 = vmul.f32 %v215, %v323
        %v345 = vmul.f32 %v216, %v323
        %v346 = vmul.f32 %v217, %v323
        %v347 = vmul.f32 %v218, %v323
        %v348 = vmul.f32 %v219, %v323
        %v349 = vmul.f32 %v220, %v323
        %v350 = vmul.f32 %v221, %v323
        %v351 = vmul.f32 %v222, %v323
        %v352 = vmul.f32 %v223, %v323
        %v353 = vmul.f32 %v224, %v323
        %v354 = vmul.f32 %v225, %v323
        %v355 = vmul.f32 %v226, %v323
        %v356 = vmul.f32 %v227, %v323
        %v357 = vmul.f32 %v228, %v323
        %v358 = vmul.f32 %v229, %v323
        %v359 = vmul.f32 %v230, %v323
        %v360 = vmul.f32 %v231, %v323
        %v361 = vmul.f32 %v232, %v323
        %v362 = vmul.f32 %v233, %v323
        %v363 = vmul.f32 %v234, %v323
        %v364 = vmul.f32 %v235, %v323
        %v365 = vmul.f32 %v236, %v323
        %v366 = vmul.f32 %v237, %v323
        %v367 = vmul.f32 %v238, %v323
        %v368 = vmul.f32 %v239, %v323
        %v369 = vmul.f32 %v240, %v323
        %v370 = vmul.f32 %v241, %v323
        %v371 = vmul.f32 %v242, %v323
        %v372 = vmul.f32 %v243, %v323
        %v373 = vmul.f32 %v244, %v323
        %v374 = vmul.f32 %v245, %v323
        %v375 = vmul.f32 %v246, %v323
        %v376 = vmul.f32 %v247, %v323
        %v377 = vmul.f32 %v248, %v323
        %v378 = vmul.f32 %v249, %v323
        %v379 = vmul.f32 %v250, %v323
        %v380 = vmul.f32 %v251, %v323
        %v381 = vmul.f32 %v252, %v323
        %v382 = vmul.f32 %v253, %v323
        %v383 = vmul.f32 %v254, %v323
        %v384 = vmul.f32 %v255, %v323
        %v385 = vmul.f32 %v256, %v323
        %v386 = vmul.f32 %v257, %v323
        %v387 = vmul.f32 %v258, %v323
        %v388 = vmul.f32 %v259, %v323
        %v389 = vmul.f32 %v260, %v323
        %v390 = vmul.f32 %v261, %v323
        %v391 = vmul.f32 %v262, %v323
        %v392 = vmul.f32 %v263, %v323
        %v393 = vmul.f32 %v264, %v323
        %v394 = vmul.f32 %v265, %v323
        %v395 = vmul.f32 %v266, %v323
        %v396 = vmul.f32 %v267, %v323
        %v397 = vmul.f32 %v268, %v323
        %v398 = vmul.f32 %v269, %v323
        %v399 = vmul.f32 %v270, %v323
        %v400 = vmul.f32 %v271, %v323
        %v401 = vmul.f32 %v272, %v323
        %v402 = vmul.f32 %v273, %v323
        %v403 = vmul.f32 %v274, %v323
        %v404 = vmul.f32 %v275, %v323
        %v405 = vmul.f32 %v276, %v323
        %v406 = vmul.f32 %v277, %v323
        %v407 = vmul.f32 %v278, %v323
        %v408 = vmul.f32 %v279, %v323
        %v409 = vmul.f32 %v280, %v323
        %v410 = vmul.f32 %v281, %v323
        %v411 = vmul.f32 %v282, %v323
        %v412 = vmul.f32 %v283, %v323
        %v413 = vmul.f32 %v284, %v323
        %v414 = vmul.f32 %v285, %v323
        %v415 = vmul.f32 %v286, %v323
        %v416 = vmul.f32 %v287, %v323
        %v417 = vmul.f32 %v288, %v323
        %v418 = vmul.f32 %v289, %v323
        %v419 = vmul.f32 %v290, %v323
        %v420 = vmul.f32 %v291, %v323
        %v421 = vmul.f32 %v292, %v323
        %v422 = vmul.f32 %v293, %v323
        %v423 = vmul.f32 %v294, %v323
        %v424 = vmul.f32 %v295, %v323
        %v425 = vmul.f32 %v296, %v323
        %v426 = vmul.f32 %v297, %v323
        %v427 = vmul.f32 %v298, %v323
        %v428 = vmul.f32 %v299, %v323
        %v429 = vmul.f32 %v300, %v323
        %v430 = vmul.f32 %v301, %v323
        %v431 = vmul.f32 %v302, %v323
        %v432 = vmul.f32 %v303, %v323
        %v433 = vmul.f32 %v304, %v323
        %v434 = vmul.f32 %v305, %v323
        %v435 = vmul.f32 %v306, %v323
        %v436 = vmul.f32 %v307, %v323
        %v437 = vmul.f32 %v308, %v323
        %v438 = vmul.f32 %v309, %v323
        %v439 = vmul.f32 %v310, %v323
        %v440 = vmul.f32 %v311, %v323
        %v441 = vmul.f32 %v312, %v323
        %v442 = vmul.f32 %v313, %v323
        %v443 = vmul.f32 %v314, %v323
        %v444 = vmul.f32 %v315, %v323
        %v445 = vmul.f32 %v316, %v323
        %v446 = vmul.f32 %v317, %v323
        %v447 = vmul.f32 %v318, %v323
        %v448 = vmul.f32 %v319, %v323
        %v449 = vmul.f32 %v320, %v323
        %v450 = vmul.f32 %v321, %v323
        %v451 = vmul.f32 %v322, %v323
        %v452 = vstv %s194
        %v453 = vadd.f32 %v324, %v452
        %v454 = vadd.f32 %v325, %v452
        %v455 = vadd.f32 %v326, %v452
        %v456 = vadd.f32 %v327, %v452
        %v457 = vadd.f32 %v328, %v452
        %v458 = vadd.f32 %v329, %v452
        %v459 = vadd.f32 %v330, %v452
        %v460 = vadd.f32 %v331, %v452
        %v461 = vadd.f32 %v332, %v452
        %v462 = vadd.f32 %v333, %v452
        %v463 = vadd.f32 %v334, %v452
        %v464 = vadd.f32 %v335, %v452
        %v465 = vadd.f32 %v336, %v452
        %v466 = vadd.f32 %v337, %v452
        %v467 = vadd.f32 %v338, %v452
        %v468 = vadd.f32 %v339, %v452
        %v469 = vadd.f32 %v340, %v452
        %v470 = vadd.f32 %v341, %v452
        %v471 = vadd.f32 %v342, %v452
        %v472 = vadd.f32 %v343, %v452
        %v473 = vadd.f32 %v344, %v452
        %v474 = vadd.f32 %v345, %v452
        %v475 = vadd.f32 %v346, %v452
        %v476 = vadd.f32 %v347, %v452
        %v477 = vadd.f32 %v348, %v452
        %v478 = vadd.f32 %v349, %v452
        %v479 = vadd.f32 %v350, %v452
        %v480 = vadd.f32 %v351, %v452
        %v481 = vadd.f32 %v352, %v452
        %v482 = vadd.f32 %v353, %v452
        %v483 = vadd.f32 %v354, %v452
        %v484 = vadd.f32 %v355, %v452
        %v485 = vadd.f32 %v356, %v452
        %v486 = vadd.f32 %v357, %v452
        %v487 = vadd.f32 %v358, %v452
        %v488 = vadd.f32 %v359, %v452
        %v489 = vadd.f32 %v360, %v452
        %v490 = vadd.f32 %v361, %v452
        %v491 = vadd.f32 %v362, %v452
        %v492 = vadd.f32 %v363, %v452
        %v493 = vadd.f32 %v364, %v452
        %v494 = vadd.f32 %v365, %v452
        %v495 = vadd.f32 %v366, %v452
        %v496 = vadd.f32 %v367, %v452
        %v497 = vadd.f32 %v368, %v452
        %v498 = vadd.f32 %v369, %v452
        %v499 = vadd.f32 %v370, %v452
        %v500 = vadd.f32 %v371, %v452
        %v501 = vadd.f32 %v372, %v452
        %v502 = vadd.f32 %v373, %v452
        %v503 = vadd.f32 %v374, %v452
        %v504 = vadd.f32 %v375, %v452
        %v505 = vadd.f32 %v376, %v452
        %v506 = vadd.f32 %v377, %v452
        %v507 = vadd.f32 %v378, %v452
        %v508 = vadd.f32 %v379, %v452
        %v509 = vadd.f32 %v380, %v452
        %v510 = vadd.f32 %v381, %v452
        %v511 = vadd.f32 %v382, %v452
        %v512 = vadd.f32 %v383, %v452
        %v513 = vadd.f32 %v384, %v452
        %v514 = vadd.f32 %v385, %v452
        %v515 = vadd.f32 %v386, %v452
        %v516 = vadd.f32 %v387, %v452
        %v517 = vadd.f32 %v388, %v452
        %v518 = vadd.f32 %v389, %v452
        %v519 = vadd.f32 %v390, %v452
        %v520 = vadd.f32 %v391, %v452
        %v521 = vadd.f32 %v392, %v452
        %v522 = vadd.f32 %v393, %v452
        %v523 = vadd.f32 %v394, %v452
        %v524 = vadd.f32 %v395, %v452
        %v525 = vadd.f32 %v396, %v452
        %v526 = vadd.f32 %v397, %v452
        %v527 = vadd.f32 %v398, %v452
        %v528 = vadd.f32 %v399, %v452
        %v529 = vadd.f32 %v400, %v452
        %v530 = vadd.f32 %v401, %v452
        %v531 = vadd.f32 %v402, %v452
        %v532 = vadd.f32 %v403, %v452
        %v533 = vadd.f32 %v404, %v452
        %v534 = vadd.f32 %v405, %v452
        %v535 = vadd.f32 %v406, %v452
        %v536 = vadd.f32 %v407, %v452
        %v537 = vadd.f32 %v408, %v452
        %v538 = vadd.f32 %v409, %v452
        %v539 = vadd.f32 %v410, %v452
        %v540 = vadd.f32 %v411, %v452
        %v541 = vadd.f32 %v412, %v452
        %v542 = vadd.f32 %v413, %v452
        %v543 = vadd.f32 %v414, %v452
        %v544 = vadd.f32 %v415, %v452
        %v545 = vadd.f32 %v416, %v452
        %v546 = vadd.f32 %v417, %v452
        %v547 = vadd.f32 %v418, %v452
        %v548 = vadd.f32 %v419, %v452
        %v549 = vadd.f32 %v420, %v452
        %v550 = vadd.f32 %v421, %v452
        %v551 = vadd.f32 %v422, %v452
        %v552 = vadd.f32 %v423, %v452
        %v553 = vadd.f32 %v424, %v452
        %v554 = vadd.f32 %v425, %v452
        %v555 = vadd.f32 %v426, %v452
        %v556 = vadd.f32 %v427, %v452
        %v557 = vadd.f32 %v428, %v452
        %v558 = vadd.f32 %v429, %v452
        %v559 = vadd.f32 %v430, %v452
        %v560 = vadd.f32 %v431, %v452
        %v561 = vadd.f32 %v432, %v452
        %v562 = vadd.f32 %v433, %v452
        %v563 = vadd.f32 %v434, %v452
        %v564 = vadd.f32 %v435, %v452
        %v565 = vadd.f32 %v436, %v452
        %v566 = vadd.f32 %v437, %v452
        %v567 = vadd.f32 %v438, %v452
        %v568 = vadd.f32 %v439, %v452
        %v569 = vadd.f32 %v440, %v452
        %v570 = vadd.f32 %v441, %v452
        %v571 = vadd.f32 %v442, %v452
        %v572 = vadd.f32 %v443, %v452
        %v573 = vadd.f32 %v444, %v452
        %v574 = vadd.f32 %v445, %v452
        %v575 = vadd.f32 %v446, %v452
        %v576 = vadd.f32 %v447, %v452
        %v577 = vadd.f32 %v448, %v452
        %v578 = vadd.f32 %v449, %v452
        %v579 = vadd.f32 %v450, %v452
        %v580 = vadd.f32 %v451, %v452
        %581 = vst [vmem:[%s190] sm:$0xff] %v453
        %582 = vst [vmem:[%s190 + $0x8] sm:$0xff] %v454
        %583 = vst [vmem:[%s190 + $0x10] sm:$0xff] %v455
        %584 = vst [vmem:[%s190 + $0x18] sm:$0xff] %v456
        %585 = vst [vmem:[%s190 + $0x20] sm:$0xff] %v457
        %586 = vst [vmem:[%s190 + $0x28] sm:$0xff] %v458
        %587 = vst [vmem:[%s190 + $0x30] sm:$0xff] %v459
        %588 = vst [vmem:[%s190 + $0x38] sm:$0xff] %v460
        %589 = vst [vmem:[%s190 + $0x40] sm:$0xff] %v461
        %590 = vst [vmem:[%s190 + $0x48] sm:$0xff] %v462
        %591 = vst [vmem:[%s190 + $0x50] sm:$0xff] %v463
        %592 = vst [vmem:[%s190 + $0x58] sm:$0xff] %v464
        %593 = vst [vmem:[%s190 + $0x60] sm:$0xff] %v465
        %594 = vst [vmem:[%s190 + $0x68] sm:$0xff] %v466
        %595 = vst [vmem:[%s190 + $0x70] sm:$0xff] %v467
        %596 = vst [vmem:[%s190 + $0x78] sm:$0xff] %v468
        %597 = vst [vmem:[%s190 + $0x80] sm:$0xff] %v469
        %598 = vst [vmem:[%s190 + $0x88] sm:$0xff] %v470
        %599 = vst [vmem:[%s190 + $0x90] sm:$0xff] %v471
        %600 = vst [vmem:[%s190 + $0x98] sm:$0xff] %v472
        %601 = vst [vmem:[%s190 + $0xa0] sm:$0xff] %v473
        %602 = vst [vmem:[%s190 + $0xa8] sm:$0xff] %v474
        %603 = vst [vmem:[%s190 + $0xb0] sm:$0xff] %v475
        %604 = vst [vmem:[%s190 + $0xb8] sm:$0xff] %v476
        %605 = vst [vmem:[%s190 + $0xc0] sm:$0xff] %v477
        %606 = vst [vmem:[%s190 + $0xc8] sm:$0xff] %v478
        %607 = vst [vmem:[%s190 + $0xd0] sm:$0xff] %v479
        %608 = vst [vmem:[%s190 + $0xd8] sm:$0xff] %v480
        %609 = vst [vmem:[%s190 + $0xe0] sm:$0xff] %v481
        %610 = vst [vmem:[%s190 + $0xe8] sm:$0xff] %v482
        %611 = vst [vmem:[%s190 + $0xf0] sm:$0xff] %v483
        %612 = vst [vmem:[%s190 + $0xf8] sm:$0xff] %v484
        %613 = vst [vmem:[%s190 + $0x100] sm:$0xff] %v485
        %614 = vst [vmem:[%s190 + $0x108] sm:$0xff] %v486
        %615 = vst [vmem:[%s190 + $0x110] sm:$0xff] %v487
        %616 = vst [vmem:[%s190 + $0x118] sm:$0xff] %v488
        %617 = vst [vmem:[%s190 + $0x120] sm:$0xff] %v489
        %618 = vst [vmem:[%s190 + $0x128] sm:$0xff] %v490
        %619 = vst [vmem:[%s190 + $0x130] sm:$0xff] %v491
        %620 = vst [vmem:[%s190 + $0x138] sm:$0xff] %v492
        %621 = vst [vmem:[%s190 + $0x140] sm:$0xff] %v493
        %622 = vst [vmem:[%s190 + $0x148] sm:$0xff] %v494
        %623 = vst [vmem:[%s190 + $0x150] sm:$0xff] %v495
        %624 = vst [vmem:[%s190 + $0x158] sm:$0xff] %v496
        %625 = vst [vmem:[%s190 + $0x160] sm:$0xff] %v497
        %626 = vst [vmem:[%s190 + $0x168] sm:$0xff] %v498
        %627 = vst [vmem:[%s190 + $0x170] sm:$0xff] %v499
        %628 = vst [vmem:[%s190 + $0x178] sm:$0xff] %v500
        %629 = vst [vmem:[%s190 + $0x180] sm:$0xff] %v501
        %630 = vst [vmem:[%s190 + $0x188] sm:$0xff] %v502
        %631 = vst [vmem:[%s190 + $0x190] sm:$0xff] %v503
        %632 = vst [vmem:[%s190 + $0x198] sm:$0xff] %v504
        %633 = vst [vmem:[%s190 + $0x1a0] sm:$0xff] %v505
        %634 = vst [vmem:[%s190 + $0x1a8] sm:$0xff] %v506
        %635 = vst [vmem:[%s190 + $0x1b0] sm:$0xff] %v507
        %636 = vst [vmem:[%s190 + $0x1b8] sm:$0xff] %v508
        %637 = vst [vmem:[%s190 + $0x1c0] sm:$0xff] %v509
        %638 = vst [vmem:[%s190 + $0x1c8] sm:$0xff] %v510
        %639 = vst [vmem:[%s190 + $0x1d0] sm:$0xff] %v511
        %640 = vst [vmem:[%s190 + $0x1d8] sm:$0xff] %v512
        %641 = vst [vmem:[%s190 + $0x1e0] sm:$0xff] %v513
        %642 = vst [vmem:[%s190 + $0x1e8] sm:$0xff] %v514
        %643 = vst [vmem:[%s190 + $0x1f0] sm:$0xff] %v515
        %644 = vst [vmem:[%s190 + $0x1f8] sm:$0xff] %v516
        %645 = vst [vmem:[%s190 + $0x200] sm:$0xff] %v517
        %646 = vst [vmem:[%s190 + $0x208] sm:$0xff] %v518
        %647 = vst [vmem:[%s190 + $0x210] sm:$0xff] %v519
        %648 = vst [vmem:[%s190 + $0x218] sm:$0xff] %v520
        %649 = vst [vmem:[%s190 + $0x220] sm:$0xff] %v521
        %650 = vst [vmem:[%s190 + $0x228] sm:$0xff] %v522
        %651 = vst [vmem:[%s190 + $0x230] sm:$0xff] %v523
        %652 = vst [vmem:[%s190 + $0x238] sm:$0xff] %v524
        %653 = vst [vmem:[%s190 + $0x240] sm:$0xff] %v525
        %654 = vst [vmem:[%s190 + $0x248] sm:$0xff] %v526
        %655 = vst [vmem:[%s190 + $0x250] sm:$0xff] %v527
        %656 = vst [vmem:[%s190 + $0x258] sm:$0xff] %v528
        %657 = vst [vmem:[%s190 + $0x260] sm:$0xff] %v529
        %658 = vst [vmem:[%s190 + $0x268] sm:$0xff] %v530
        %659 = vst [vmem:[%s190 + $0x270] sm:$0xff] %v531
        %660 = vst [vmem:[%s190 + $0x278] sm:$0xff] %v532
        %661 = vst [vmem:[%s190 + $0x280] sm:$0xff] %v533
        %662 = vst [vmem:[%s190 + $0x288] sm:$0xff] %v534
        %663 = vst [vmem:[%s190 + $0x290] sm:$0xff] %v535
        %664 = vst [vmem:[%s190 + $0x298] sm:$0xff] %v536
        %665 = vst [vmem:[%s190 + $0x2a0] sm:$0xff] %v537
        %666 = vst [vmem:[%s190 + $0x2a8] sm:$0xff] %v538
        %667 = vst [vmem:[%s190 + $0x2b0] sm:$0xff] %v539
        %668 = vst [vmem:[%s190 + $0x2b8] sm:$0xff] %v540
        %669 = vst [vmem:[%s190 + $0x2c0] sm:$0xff] %v541
        %670 = vst [vmem:[%s190 + $0x2c8] sm:$0xff] %v542
        %671 = vst [vmem:[%s190 + $0x2d0] sm:$0xff] %v543
        %672 = vst [vmem:[%s190 + $0x2d8] sm:$0xff] %v544
        %673 = vst [vmem:[%s190 + $0x2e0] sm:$0xff] %v545
        %674 = vst [vmem:[%s190 + $0x2e8] sm:$0xff] %v546
        %675 = vst [vmem:[%s190 + $0x2f0] sm:$0xff] %v547
        %676 = vst [vmem:[%s190 + $0x2f8] sm:$0xff] %v548
        %677 = vst [vmem:[%s190 + $0x300] sm:$0xff] %v549
        %678 = vst [vmem:[%s190 + $0x308] sm:$0xff] %v550
        %679 = vst [vmem:[%s190 + $0x310] sm:$0xff] %v551
        %680 = vst [vmem:[%s190 + $0x318] sm:$0xff] %v552
        %681 = vst [vmem:[%s190 + $0x320] sm:$0xff] %v553
        %682 = vst [vmem:[%s190 + $0x328] sm:$0xff] %v554
        %683 = vst [vmem:[%s190 + $0x330] sm:$0xff] %v555
        %684 = vst [vmem:[%s190 + $0x338] sm:$0xff] %v556
        %685 = vst [vmem:[%s190 + $0x340] sm:$0xff] %v557
        %686 = vst [vmem:[%s190 + $0x348] sm:$0xff] %v558
        %687 = vst [vmem:[%s190 + $0x350] sm:$0xff] %v559
        %688 = vst [vmem:[%s190 + $0x358] sm:$0xff] %v560
        %689 = vst [vmem:[%s190 + $0x360] sm:$0xff] %v561
        %690 = vst [vmem:[%s190 + $0x368] sm:$0xff] %v562
        %691 = vst [vmem:[%s190 + $0x370] sm:$0xff] %v563
        %692 = vst [vmem:[%s190 + $0x378] sm:$0xff] %v564
        %693 = vst [vmem:[%s190 + $0x380] sm:$0xff] %v565
        %694 = vst [vmem:[%s190 + $0x388] sm:$0xff] %v566
        %695 = vst [vmem:[%s190 + $0x390] sm:$0xff] %v567
        %696 = vst [vmem:[%s190 + $0x398] sm:$0xff] %v568
        %697 = vst [vmem:[%s190 + $0x3a0] sm:$0xff] %v569
        %698 = vst [vmem:[%s190 + $0x3a8] sm:$0xff] %v570
        %699 = vst [vmem:[%s190 + $0x3b0] sm:$0xff] %v571
        %700 = vst [vmem:[%s190 + $0x3b8] sm:$0xff] %v572
        %701 = vst [vmem:[%s190 + $0x3c0] sm:$0xff] %v573
        %702 = vst [vmem:[%s190 + $0x3c8] sm:$0xff] %v574
        %703 = vst [vmem:[%s190 + $0x3d0] sm:$0xff] %v575
        %704 = vst [vmem:[%s190 + $0x3d8] sm:$0xff] %v576
        %705 = vst [vmem:[%s190 + $0x3e0] sm:$0xff] %v577
        %706 = vst [vmem:[%s190 + $0x3e8] sm:$0xff] %v578
        %707 = vst [vmem:[%s190 + $0x3f0] sm:$0xff] %v579
        %708 = vst [vmem:[%s190 + $0x3f8] sm:$0xff] %v580
        %s709 = sand.u32 %s98, 1
        %s710 = scalar_lea.sflag [#allocation6], %s709
        %s711 = sand.u32 %s98, 1
        %s712 = smul.addr %s711, 1024
        %s713 = scalar_lea.vmem [#allocation7], %s712
        // Predicated region
        $region37: #{tpu_custom_call.1} parent=31 // pred_check
          %p714 = pneg %p108
        $region38: #{tpu_custom_call.1} parent=31 // pred_check_branch
          %716 = sbr.rel (%p714) target = $region40
        $region39: #{tpu_custom_call.1} parent=31 // pred_region
          %s717 = smul.u32 128, %s22
          %s719 = ssub.s32 16384, 16384
          %720 = vsyncadd %s710, %s719
          %s721 = smul.addr %s717, 128
          %s722 = scalar_lea.hbm %s3, %s721
          %s723 = sshll.u32 %s713, 4
          %s724 = int_to_ptr.vmem [resolvable:$true] %s723
          %729 = dma.vmem_to_hbm [thread:$0]  %s724, 16384, %s722, %s710, 128, 128, 8
        $region40: #{tpu_custom_call.1} parent=31 // pred_fallthru
          _
      $region32: #{tpu_custom_call.1} parent=5 // pred_fallthru
        _
      %p730 = scmp.le.s32.totalorder 2, %s17
      // Predicated region
      $region41: #{tpu_custom_call.1} parent=5 // pred_check
        %p731 = pneg %p730
      $region42: #{tpu_custom_call.1} parent=5 // pred_check_branch
        %733 = sbr.rel (%p731) target = $region44
      $region43: #{tpu_custom_call.1} parent=5 // pred_region
        %s734 = ssub.s32 %s17, 2
        // Predicated region
        $region45: #{tpu_custom_call.1} parent=43 // pred_check
          %p735 = pneg %p114
        $region46: #{tpu_custom_call.1} parent=43 // pred_check_branch
          %737 = sbr.rel (%p735) target = $region48
        $region47: #{tpu_custom_call.1} parent=43 // pred_region
          %s738 = sand.u32 %s99, 1
          %s739 = scalar_lea.sflag [#allocation6], %s738
          %s740 = sand.u32 %s99, 1
          %s741 = smul.addr %s740, 1024
          %s742 = scalar_lea.vmem [#allocation7], %s741
          %743 = dma.done %s739, 16384
        $region48: #{tpu_custom_call.1} parent=43 // pred_fallthru
          _
      $region44: #{tpu_custom_call.1} parent=5 // pred_fallthru
        _
    $region6: #{tpu_custom_call.1} parent=1 // loop_footer
      %s21 = sadd.s32 1, %s17
    $region7: #{tpu_custom_call.1} parent=1 // loop_footer_branch
      %16 = sbr.rel target = $region3
    $region8: #{tpu_custom_call.1} parent=1 // loop_exit
      _
    %744 = vsyncpa [#allocation5], 1
    %s745 = scalar_lea.sflag [#allocation5], 1
    %746 = vsyncpa %s745, 1
    %747 = vsyncpa [#allocation6], 1
    %s748 = scalar_lea.sflag [#allocation6], 1
    %749 = vsyncpa %s748, 1

</llo_original>
